<compile_context>
chip_gen: v5e
topology: v5e:2x2
jax: 0.10.0
libtpu: 0.0.40
codegen_flags: <defaults>
</compile_context>

<pallas_src>
import math

import jax
import jax.numpy as jnp
from jax.experimental import pallas as pl
from jax.experimental.pallas import tpu as pltpu


def make_frequences(embedding_dim: int) -> jnp.ndarray:
    # Matches the PyTorch __init__ exactly:
    # f = linspace(2/d, d, d//2); f = 1 / 10000**f
    f = jnp.linspace(2.0 / embedding_dim, float(embedding_dim),
                     embedding_dim // 2, dtype=jnp.float32)
    return 1.0 / (10000.0 ** f)


def _pos_emb_kernel(tab_ref, pos_ref, x_ref, o_ref):
    # tab_ref: (3, L) f32  row0: freq per lane, row1: phase (0 / pi/2),
    #                      row2: folded-row offset per lane (0..k-1)
    # pos_ref: (TILE_R, 1) f32  base sequence position of each folded row
    # x_ref / o_ref: (1, TILE_R, L)
    tab = tab_ref[...]
    freq = tab[0:1, :]
    phase = tab[1:2, :]
    lane_off = tab[2:3, :]
    pos = pos_ref[...] + lane_off                      # (TILE_R, L)
    # even lanes: sin(pos*f); odd lanes: sin(pos*f + pi/2) == cos(pos*f)
    emb = jnp.sin(pos * freq + phase)                  # f32, EUP; hides under DMA
    # add in f32, downcast once on store
    o_ref[...] = (x_ref[...].astype(jnp.float32) + emb[None, :, :]).astype(o_ref.dtype)


def _vmem_budget_and_limit():
    """Generation-aware (budget_for_tiling, vmem_limit_bytes)."""
    try:
        cap = int(pltpu.get_tpu_info().vmem_capacity_bytes)
    except Exception:
        cap = 64 * 1024 * 1024                         # conservative (v7x-sized)
    if cap >= 128 * 1024 * 1024:                       # v5e / v6e
        return 48 * 1024 * 1024, 64 * 1024 * 1024
    return 24 * 1024 * 1024, 32 * 1024 * 1024          # v7x


def _pick_tile_rows(n_rows: int, row_lanes: int, itemsize: int, budget: int) -> int:
    """Largest row tile whose live buffers fit the budget (multiple of 8 rows)."""
    # 2x double-buffered input + 2x output blocks + ~2 rows of f32 temporaries
    per_row = row_lanes * (4 * itemsize + 8)
    cap = max(8, budget // max(per_row, 1))
    if n_rows <= cap:
        return n_rows
    cap = max(8, (cap // 8) * 8)
    t = cap
    while t >= 8:                                      # prefer a tile dividing n_rows
        if n_rows % t == 0:
            return t
        t -= 8
    return cap                                         # partial last tile is masked


def position_embedding(sequence: jnp.ndarray, embedding_dim: int) -> jnp.ndarray:
    """sequence: (B, S, D) with D == embedding_dim. Returns sequence + emb."""
    B, S, D = sequence.shape
    assert D == embedding_dim
    assert D % 2 == 0

    # Fold k consecutive sequence rows into the lane axis so blocks end on a
    # multiple of 128 lanes (lane-dense stores). k == 1 when D % 128 == 0.
    if D % 128 == 0:
        k = 1
    else:
        k = math.lcm(D, 128) // D
        if S % k != 0:
            k = 1   # TODO(synk): pad S to a multiple of k to keep lane-dense stores.
    L = k * D
    S_f = S // k

    # (3, L) table: per-lane frequency, parity phase, folded-row offset.
    f = make_frequences(embedding_dim)                                   # (D//2,)
    freq_rep = jnp.repeat(f, 2)                                          # (D,)
    phase = jnp.tile(jnp.array([0.0, math.pi / 2.0], dtype=jnp.float32), D // 2)
    lane_off = jnp.repeat(jnp.arange(k, dtype=jnp.float32), D)           # (L,)
    tab = jnp.stack([jnp.tile(freq_rep, k), jnp.tile(phase, k), lane_off], axis=0)

    # Base positions of the folded rows. (f32 positions lose precision past
    # ~2^24; fine for practical sequence lengths.)
    pos = (jnp.arange(S_f, dtype=jnp.float32) * float(k)).reshape(S_f, 1)

    x = sequence.reshape(B, S_f, L)

    budget, vmem_limit = _vmem_budget_and_limit()
    tile_r = _pick_tile_rows(S_f, L, jnp.dtype(sequence.dtype).itemsize, budget)
    n_r = pl.cdiv(S_f, tile_r)

    out = pl.pallas_call(
        _pos_emb_kernel,
        out_shape=jax.ShapeDtypeStruct((B, S_f, L), sequence.dtype),
        grid=(n_r, B),
        in_specs=[
            pl.BlockSpec((3, L), lambda r, b: (0, 0)),            # freq/phase/offset
            pl.BlockSpec((tile_r, 1), lambda r, b: (r, 0)),       # base positions
            pl.BlockSpec((1, tile_r, L), lambda r, b: (b, r, 0)), # sequence tile
        ],
        out_specs=pl.BlockSpec((1, tile_r, L), lambda r, b: (b, r, 0)),
        input_output_aliases={2: 0},                              # donate sequence
        compiler_params=pltpu.CompilerParams(
            # No carried state in the kernel -> both axes parallel (v7x megacore).
            dimension_semantics=("parallel", "parallel"),
            vmem_limit_bytes=vmem_limit,
        ),
    )(tab, pos, x)
    return out.reshape(B, S, D)


def _reference(sequence: jnp.ndarray, embedding_dim: int) -> jnp.ndarray:
    # Pure-JAX reference mirroring the PyTorch forward.
    S = sequence.shape[-2]
    f = make_frequences(embedding_dim)[None, :]                    # (1, D//2)
    pos = jnp.arange(S, dtype=jnp.float32)[:, None] * f            # (S, D//2)
    emb = jnp.zeros((S, embedding_dim), dtype=jnp.float32)
    emb = emb.at[:, 0::2].set(jnp.sin(pos))
    emb = emb.at[:, 1::2].set(jnp.cos(pos))
    return (sequence.astype(jnp.float32) + emb).astype(sequence.dtype)


if __name__ == "__main__":
    B, S, D = 2, 8, 32
    key = jax.random.PRNGKey(0)
    x = jax.random.normal(key, (B, S, D), dtype=jnp.float32)

    ref = _reference(x, embedding_dim=D)     # compute before the (aliased) call

    out = position_embedding(x, embedding_dim=D)
    out = jax.block_until_ready(out)

    assert out.shape == (B, S, D)
    assert jnp.allclose(out, ref, atol=1e-5, rtol=1e-5), "mismatch vs reference"

    print("KERNEL_OK")
</pallas_src>

<mosaic_0001>
module attributes {stable_mosaic.version = 11 : i64} {
  func.func @_pos_emb_kernel(%arg0: i32, %arg1: i32, %arg2: memref<3x128xf32, #tpu.memory_space<vmem>>, %arg3: memref<2x1xf32, #tpu.memory_space<vmem>>, %arg4: memref<1x2x128xf32, #tpu.memory_space<vmem>>, %arg5: memref<1x2x128xf32, #tpu.memory_space<vmem>>) attributes {dimension_semantics = [#tpu.dimension_semantics<parallel>, #tpu.dimension_semantics<parallel>], iteration_bounds = array<i64: 1, 2>, scalar_prefetch = 0 : i64, scratch_operands = 0 : i64, tpu.core_type = #tpu.core_type<tc>, window_params = [{pipeline_mode = #tpu.pipeline_mode<synchronous>, transform_indices = @transform_0, window_bounds = array<i64: 3, 128>}, {transform_indices = @transform_1, window_bounds = array<i64: 2, 1>}, {transform_indices = @transform_2, window_bounds = array<i64: 1, 2, 128>}, {transform_indices = @transform_3, window_bounds = array<i64: 1, 2, 128>}]} {
    %c0 = arith.constant 0 : index
    %c0_0 = arith.constant 0 : index
    %0 = vector.load %arg2[%c0, %c0_0] : memref<3x128xf32, #tpu.memory_space<vmem>>, vector<3x128xf32>
    %1 = vector.extract_strided_slice %0 {offsets = [0, 0], sizes = [1, 128], strides = [1, 1]} : vector<3x128xf32> to vector<1x128xf32>
    %2 = vector.extract_strided_slice %0 {offsets = [1, 0], sizes = [1, 128], strides = [1, 1]} : vector<3x128xf32> to vector<1x128xf32>
    %3 = vector.extract_strided_slice %0 {offsets = [2, 0], sizes = [1, 128], strides = [1, 1]} : vector<3x128xf32> to vector<1x128xf32>
    %c0_1 = arith.constant 0 : index
    %c0_2 = arith.constant 0 : index
    %4 = vector.load %arg3[%c0_1, %c0_2] : memref<2x1xf32, #tpu.memory_space<vmem>>, vector<2x1xf32>
    %5 = vector.broadcast %4 : vector<2x1xf32> to vector<2x128xf32>
    %6 = vector.broadcast %3 : vector<1x128xf32> to vector<2x128xf32>
    %7 = arith.addf %5, %6 : vector<2x128xf32>
    %8 = vector.broadcast %1 : vector<1x128xf32> to vector<2x128xf32>
    %9 = arith.mulf %7, %8 : vector<2x128xf32>
    %10 = vector.broadcast %2 : vector<1x128xf32> to vector<2x128xf32>
    %11 = arith.addf %9, %10 : vector<2x128xf32>
    %12 = math.sin %11 : vector<2x128xf32>
    %c0_3 = arith.constant 0 : index
    %c0_4 = arith.constant 0 : index
    %c0_5 = arith.constant 0 : index
    %13 = vector.load %arg4[%c0_3, %c0_4, %c0_5] : memref<1x2x128xf32, #tpu.memory_space<vmem>>, vector<1x2x128xf32>
    %14 = vector.shape_cast %12 : vector<2x128xf32> to vector<1x2x128xf32>
    %15 = arith.addf %13, %14 : vector<1x2x128xf32>
    %c0_6 = arith.constant 0 : index
    %c0_7 = arith.constant 0 : index
    %c0_8 = arith.constant 0 : index
    %16 = vector.load %arg5[%c0_6, %c0_7, %c0_8] : memref<1x2x128xf32, #tpu.memory_space<vmem>>, vector<1x2x128xf32>
    tpu.vector_store %arg5[%c0_6, %c0_7, %c0_8], %15 {strides = array<i32>} : memref<1x2x128xf32, #tpu.memory_space<vmem>>, vector<1x2x128xf32>,
    return
  }
  func.func @transform_0(%arg0: i32, %arg1: i32) -> (i32, i32) {
    %c0_i32 = arith.constant 0 : i32
    %c0_i32_0 = arith.constant 0 : i32
    %c0_i32_1 = arith.constant 0 : i32
    return %c0_i32, %c0_i32_0 : i32, i32
  }
  func.func @transform_1(%arg0: i32, %arg1: i32) -> (i32, i32) {
    %c0_i32 = arith.constant 0 : i32
    %c0_i32_0 = arith.constant 0 : i32
    return %arg0, %c0_i32 : i32, i32
  }
  func.func @transform_2(%arg0: i32, %arg1: i32) -> (i32, i32, i32) {
    %c0_i32 = arith.constant 0 : i32
    %c0_i32_0 = arith.constant 0 : i32
    return %arg1, %arg0, %c0_i32 : i32, i32, i32
  }
  func.func @transform_3(%arg0: i32, %arg1: i32) -> (i32, i32, i32) {
    %c0_i32 = arith.constant 0 : i32
    %c0_i32_0 = arith.constant 0 : i32
    return %arg1, %arg0, %c0_i32 : i32, i32, i32
  }
}

</mosaic_0001>

<llo_original>
// kernel: tpu_custom_call.1
$region0: #{tpu_custom_call.1}
  #allocation0 [shape = 'u32[]', space=smem, size = 0x4, offset = 0x4, fixed_abs, tag = 'smem constant byte address 0x4 - core index']
  #allocation1 [shape = 'u32[72,128]{1,0:T(1,128)}', space=vmem, size = 0x9000, scoped, tag = 'internal scratch']
  %s0 = inlined_call_operand.vmem [shape: f32[3,128], index: 0, kind: input, shape index: {}]
  %s1 = inlined_call_operand.vmem [shape: f32[2,1], index: 1, kind: input, shape index: {}]
  %s2 = inlined_call_operand.hbm [shape: f32[2,2,128], index: 2, kind: input, shape index: {}, may-alias: {2,3}]
  %s3 = inlined_call_operand.hbm [shape: f32[2,2,128], index: 3, kind: output, shape index: {}, may-alias: {2,3}]
  %s4 = sld [smem:[#allocation0]]
  $region49: #{tpu_custom_call.1} parent=0
    _
  %s6 = ssub.s32 1, %s4
  %s7 = scalar_select 0, %s6, %s4
  $region1: #{tpu_custom_call.1} parent=0
    #allocation2 [shape = 'u8[2048]{0}', space=vmem, size = 0x800, scoped, tag = 'input window, operand 2']
    #allocation3 [shape = 's32[2]{0}', space=sflag, size = 0x8, scoped, tag = 'scoped memory for tpu_custom_call.1']
    #allocation4 [shape = 's32[2]{0}', space=sflag, size = 0x8, scoped, tag = 'scoped memory for tpu_custom_call.1']
    #allocation5 [shape = 'u8[2048]{0}', space=vmem, size = 0x800, scoped, tag = 'output window, operand 0']
    %8 = vsyncpa [#allocation3], 0
    %s9 = scalar_lea.sflag [#allocation3], 1
    %10 = vsyncpa %s9, 0
    %11 = vsyncpa [#allocation4], 0
    %s12 = scalar_lea.sflag [#allocation4], 1
    %13 = vsyncpa %s12, 0
    loop: start=0, step=1, limit=4
    $region2: #{tpu_custom_call.1} parent=1 // loop_pre_header
      _
    $region3: #{tpu_custom_call.1} parent=1 // loop_header
      %s15 = sphi 0, %s19
      %p16 = scmp.ge.s32.totalorder %s15, 4
      %s22 = sphi 0, %s34
      %s23 = sphi 0, %s30
      %s24 = sphi 0, %s22
      %s25 = sphi 0, %s23
      %s26 = sphi 0, %s24
      %s27 = sphi 0, %s25
      %s35 = sphi 0, %s35
      %s37 = sphi 0, %s35
      %s38 = sphi 0, %s37
      %s52 = sphi 0, %s38
      %s58 = sphi 0, %s60
      %s61 = sphi 0, %s58
      %s62 = sphi 0, %s61
      %s78 = sphi 0, %s62
      %s86 = sphi 0, %s88
      %s89 = sphi 0, %s86
      %s90 = sphi 0, %s89
      %s106 = sphi 0, %s90
      %s114 = sphi 0, %s116
      %s117 = sphi 0, %s114
      %s118 = sphi 0, %s117
      %s134 = sphi 0, %s118
    $region4: #{tpu_custom_call.1} parent=1 // loop_header_branch
      %18 = sbr.rel (%p16) target = $region8
    $region5: #{tpu_custom_call.1} parent=1 // loop_body
      %s20 = ssub.s32 %s15, 1
      %s21 = ssub.s32 %s15, 2
      %s28 = sadd.s32 1, %s23
      %p29 = scmp.ge.s32.totalorder %s28, 2
      %s30 = scalar_select %p29, 0, %s28
      %s31 = sadd.s32 1, %s22
      %s32 = scalar_select %p29, %s31, %s22
      %p33 = scmp.ge.s32.totalorder %s32, 1
      %s34 = scalar_select %p33, 0, %s32
      %s36 = sadd.s32 %s35, 1
      %p39 = scmp.eq.s32.totalorder %s15, 1
      %p40 = scmp.ne.s32.totalorder %s35, %s37
      %p41 = scmp.eq.s32.totalorder %s15, 0
      %p42 = por %p40, %p41
      %p43 = scmp.ne.s32.totalorder %s35, %s37
      %p44 = scmp.eq.s32.totalorder %s20, 1
      %p45 = por %p43, %p44
      %p46 = scmp.ne.s32.totalorder %s37, %s38
      %p47 = scmp.eq.s32.totalorder %s20, 0
      %p48 = por %p46, %p47
      %p49 = scmp.ne.s32.totalorder %s37, %s38
      %p50 = scmp.eq.s32.totalorder %s21, 1
      %p51 = por %p49, %p50
      %p53 = scmp.ne.s32.totalorder %s38, %s52
      %p54 = scmp.eq.s32.totalorder %s21, 0
      %p55 = por %p53, %p54
      %s56 = ssub.s32 %s22, %s34
      %p57 = scmp.eq.s32.totalorder %s56, 0
      %s59 = sadd.s32 %s58, 1
      %s60 = scalar_select %p57, %s58, %s59
      %p63 = pneg %p57
      %p64 = scmp.eq.s32.totalorder %s15, 1
      %p65 = por %p63, %p64
      %p66 = scmp.ne.s32.totalorder %s58, %s61
      %p67 = scmp.eq.s32.totalorder %s15, 0
      %p68 = por %p66, %p67
      %p69 = scmp.ne.s32.totalorder %s58, %s61
      %p70 = scmp.eq.s32.totalorder %s20, 1
      %p71 = por %p69, %p70
      %p72 = scmp.ne.s32.totalorder %s61, %s62
      %p73 = scmp.eq.s32.totalorder %s20, 0
      %p74 = por %p72, %p73
      %p75 = scmp.ne.s32.totalorder %s61, %s62
      %p76 = scmp.eq.s32.totalorder %s21, 1
      %p77 = por %p75, %p76
      %p79 = scmp.ne.s32.totalorder %s62, %s78
      %p80 = scmp.eq.s32.totalorder %s21, 0
      %p81 = por %p79, %p80
      %s82 = ssub.s32 %s23, %s30
      %s83 = ssub.s32 %s22, %s34
      %s84 = sor.u32 %s82, %s83
      %p85 = scmp.eq.s32.totalorder %s84, 0
      %s87 = sadd.s32 %s86, 1
      %s88 = scalar_select %p85, %s86, %s87
      %p91 = pneg %p85
      %p92 = scmp.eq.s32.totalorder %s15, 1
      %p93 = por %p91, %p92
      %p94 = scmp.ne.s32.totalorder %s86, %s89
      %p95 = scmp.eq.s32.totalorder %s15, 0
      %p96 = por %p94, %p95
      %p97 = scmp.ne.s32.totalorder %s86, %s89
      %p98 = scmp.eq.s32.totalorder %s20, 1
      %p99 = por %p97, %p98
      %p100 = scmp.ne.s32.totalorder %s89, %s90
      %p101 = scmp.eq.s32.totalorder %s20, 0
      %p102 = por %p100, %p101
      %p103 = scmp.ne.s32.totalorder %s89, %s90
      %p104 = scmp.eq.s32.totalorder %s21, 1
      %p105 = por %p103, %p104
      %p107 = scmp.ne.s32.totalorder %s90, %s106
      %p108 = scmp.eq.s32.totalorder %s21, 0
      %p109 = por %p107, %p108
      %s110 = ssub.s32 %s23, %s30
      %s111 = ssub.s32 %s22, %s34
      %s112 = sor.u32 %s110, %s111
      %p113 = scmp.eq.s32.totalorder %s112, 0
      %s115 = sadd.s32 %s114, 1
      %s116 = scalar_select %p113, %s114, %s115
      %p119 = pneg %p113
      %p120 = scmp.eq.s32.totalorder %s15, 1
      %p121 = por %p119, %p120
      %p122 = scmp.ne.s32.totalorder %s114, %s117
      %p123 = scmp.eq.s32.totalorder %s15, 0
      %p124 = por %p122, %p123
      %p125 = scmp.ne.s32.totalorder %s114, %s117
      %p126 = scmp.eq.s32.totalorder %s20, 1
      %p127 = por %p125, %p126
      %p128 = scmp.ne.s32.totalorder %s117, %s118
      %p129 = scmp.eq.s32.totalorder %s20, 0
      %p130 = por %p128, %p129
      %p131 = scmp.ne.s32.totalorder %s117, %s118
      %p132 = scmp.eq.s32.totalorder %s21, 1
      %p133 = por %p131, %p132
      %p135 = scmp.ne.s32.totalorder %s118, %s134
      %p136 = scmp.eq.s32.totalorder %s21, 0
      %p137 = por %p135, %p136
      %p138 = scmp.le.s32.totalorder 1, %s15
      %p139 = scmp.lt.s32.totalorder %s15, 3
      %p140 = pnand %p138, %p139
      %p141 = pneg %p140
      // Predicated region
      $region9: #{tpu_custom_call.1} parent=5 // pred_check
        _
      $region10: #{tpu_custom_call.1} parent=5 // pred_check_branch
        %143 = sbr.rel (%p140) target = $region12
      $region11: #{tpu_custom_call.1} parent=5 // pred_region
        %s144 = ssub.s32 %s15, 1
        // Predicated region
        $region13: #{tpu_custom_call.1} parent=11 // pred_check
          %p145 = pneg %p48
        $region14: #{tpu_custom_call.1} parent=11 // pred_check_branch
          %147 = sbr.rel (%p145) target = $region16
        $region15: #{tpu_custom_call.1} parent=11 // pred_region
          _
        $region16: #{tpu_custom_call.1} parent=11 // pred_fallthru
          _
        // Predicated region
        $region17: #{tpu_custom_call.1} parent=11 // pred_check
          %p148 = pneg %p74
        $region18: #{tpu_custom_call.1} parent=11 // pred_check_branch
          %150 = sbr.rel (%p148) target = $region20
        $region19: #{tpu_custom_call.1} parent=11 // pred_region
          %p151 = scmp.lt.s32.totalorder %s24, 0
          %s152 = scalar_select %p151, %s24, 0
          %s153 = smul.addr %s152, 2
          %s154 = scalar_lea.vmem %s1, %s153
        $region20: #{tpu_custom_call.1} parent=11 // pred_fallthru
          _
      $region12: #{tpu_custom_call.1} parent=5 // pred_fallthru
        _
      %p155 = scmp.lt.s32.totalorder %s15, 2
      // Predicated region
      $region21: #{tpu_custom_call.1} parent=5 // pred_check
        %p156 = pneg %p155
      $region22: #{tpu_custom_call.1} parent=5 // pred_check_branch
        %158 = sbr.rel (%p156) target = $region24
      $region23: #{tpu_custom_call.1} parent=5 // pred_region
        // Predicated region
        $region25: #{tpu_custom_call.1} parent=23 // pred_check
          %p159 = pneg %p96
        $region26: #{tpu_custom_call.1} parent=23 // pred_check_branch
          %161 = sbr.rel (%p159) target = $region28
        $region27: #{tpu_custom_call.1} parent=23 // pred_region
          %s162 = sand.u32 %s86, 1
          %s163 = scalar_lea.sflag [#allocation3], %s162
          %s164 = sand.u32 %s86, 1
          %s165 = smul.addr %s164, 2
          %s166 = scalar_lea.vmem [#allocation2], %s165
          %168 = vsyncadd %s163, 0
          %s169 = sadd.s32 %s22, %s23
          %s170 = smul.addr %s169, 2
          %s171 = scalar_lea.hbm %s2, %s170
          %s173 = sshll.u32 %s171, 4
          %s174 = int_to_ptr.hbm [resolvable:$true] %s173
          %s175 = sshll.u32 %s166, 4
          %s176 = int_to_ptr.vmem [resolvable:$true] %s175
          %178 = dma.hbm_to_vmem [thread:$0]  %s174, 32, %s176, %s163
        $region28: #{tpu_custom_call.1} parent=23 // pred_fallthru
          _
      $region24: #{tpu_custom_call.1} parent=5 // pred_fallthru
        _
      %p179 = scmp.le.s32.totalorder 1, %s15
      %p180 = scmp.lt.s32.totalorder %s15, 3
      %p181 = pnand %p179, %p180
      %p182 = pneg %p181
      // Predicated region
      $region29: #{tpu_custom_call.1} parent=5 // pred_check
        _
      $region30: #{tpu_custom_call.1} parent=5 // pred_check_branch
        %184 = sbr.rel (%p181) target = $region32
      $region31: #{tpu_custom_call.1} parent=5 // pred_region
        %s185 = ssub.s32 %s15, 1
        %s186 = sand.u32 %s89, 1
        %s187 = scalar_lea.sflag [#allocation3], %s186
        %s188 = sand.u32 %s89, 1
        %s189 = smul.addr %s188, 2
        %s190 = scalar_lea.vmem [#allocation2], %s189
        // Predicated region
        $region33: #{tpu_custom_call.1} parent=31 // pred_check
          %p191 = pneg %p102
        $region34: #{tpu_custom_call.1} parent=31 // pred_check_branch
          %193 = sbr.rel (%p191) target = $region36
        $region35: #{tpu_custom_call.1} parent=31 // pred_region
          %195 = dma.done %s187, 32
        $region36: #{tpu_custom_call.1} parent=31 // pred_fallthru
          _
        %p196 = pneg %p48
        %p197 = pneg %p45
        %p198 = scmp.lt.s32.totalorder %s24, 0
        %s199 = scalar_select %p198, %s24, 0
        %s200 = smul.addr %s199, 2
        %s201 = scalar_lea.vmem %s1, %s200
        %p202 = pneg %p74
        %p203 = pneg %p71
        %s204 = sand.u32 %s89, 1
        %s205 = scalar_lea.sflag [#allocation3], %s204
        %s206 = sand.u32 %s89, 1
        %s207 = smul.addr %s206, 2
        %s208 = scalar_lea.vmem [#allocation2], %s207
        %p209 = pneg %p102
        %p210 = pneg %p99
        %p211 = pneg %p130
        %p212 = pneg %p127
        %s213 = sand.u32 %s117, 1
        %s214 = scalar_lea.sflag [#allocation4], %s213
        %s215 = sand.u32 %s117, 1
        %s216 = smul.addr %s215, 2
        %s217 = scalar_lea.vmem [#allocation5], %s216
        %p218 = scmp.lt.s32.totalorder %s24, 0
        %s219 = scalar_select %p218, %s24, 0
        %s220 = smul.addr %s219, 2
        %s221 = scalar_lea.vmem %s1, %s220
        %v222 = vld [vmem:[%s0] sm:$0x7]
        %v223 = vld [vmem:[%s221] sm:$0x3]
        %225 = vset.pattern.permute.xlu0 0
        %226 = vperm.xlu0 %225, %v223
        %v227 = vpop.permute.xlu0 %226
        %v229 = vperm.slane %v222, 2
        %v230 = vadd.f32 %v227, %v229
        %v231 = vperm.slane %v222, 0
        %v232 = vmul.f32 %v230, %v231
        %v233 = vperm.slane %v222, 1
        %v234 = vadd.f32 %v232, %v233
        %v235 = vand.u32 2147483647, %v234
        %vm236 = vcmp.le.f32.partialorder %v235, 0.7853982
        %vm237 = vcmp.lt.s32.totalorder %v234, 0
        %v238 = vand.u32 %v234, 2139095040
        %v239 = vshrl.u32 %v238, 23
        %v240 = vsub.s32 %v239, 127
        %v241 = vand.u32 2147483647, %v234
        %v242 = vand.u32 %v241, 8388607
        %v243 = vor.u32 %v242, 8388608
        %v244 = vsub.s32 0, %v243
        %v245 = vadd.s32 %v240, 1
        %vm246 = vcmp.gt.s32.totalorder %v245, 0
        %v247 = vsel %vm246, %v245, 0
        %v248 = vshrl.u32 %v247, 5
        %v249 = vand.u32 %v247, 31
        %v250 = vsub.s32 32, %v249
        %v251 = vshrl.u32 683565275, %v250
        %v252 = vshll.u32 683565275, %v249
        %v253 = vshrl.u32 2475754826, %v250
        %v254 = vor.u32 %v252, %v253
        %v255 = vshll.u32 2475754826, %v249
        %v256 = vshrl.u32 2131351028, %v250
        %v257 = vor.u32 %v255, %v256
        %v258 = vshll.u32 2131351028, %v249
        %v259 = vshrl.u32 2102212464, %v250
        %v260 = vor.u32 %v258, %v259
        %v261 = vshll.u32 2102212464, %v249
        %v262 = vshrl.u32 920167782, %v250
        %v263 = vor.u32 %v261, %v262
        %v264 = vshll.u32 920167782, %v249
        %v265 = vshrl.u32 1326507024, %v250
        %v266 = vor.u32 %v264, %v265
        %vm267 = vcmp.lt.s32.totalorder %v248, 1
        %vm268 = vcmp.lt.s32.totalorder %v248, 2
        %vm269 = vcmp.lt.s32.totalorder %v248, 3
        %vm270 = vcmp.lt.s32.totalorder %v248, 4
        %v271 = vsel %vm267, %v251, %v254
        %v272 = vsel %vm270, %v260, 2102212464
        %v273 = vsel %vm269, %v257, %v272
        %v274 = vsel %vm268, %v271, %v273
        %v275 = vsel %vm267, %v254, %v257
        %v276 = vsel %vm270, %v263, 920167782
        %v277 = vsel %vm269, %v260, %v276
        %v278 = vsel %vm268, %v275, %v277
        %v279 = vsel %vm267, %v257, %v260
        %v280 = vsel %vm270, %v266, 1326507024
        %v281 = vsel %vm269, %v263, %v280
        %v282 = vsel %vm268, %v279, %v281
        %v283 = vshll.u32 %v243, 8
        %v284 = vand.u32 %v283, 65535
        %v285 = vshrl.u32 %v283, 16
        %v286 = vand.u32 %v282, 65535
        %v287 = vshrl.u32 %v282, 16
        %v288 = vmul.u32 %v284, %v286
        %v289 = vmul.u32 %v284, %v287
        %v290 = vmul.u32 %v285, %v286
        %v291 = vmul.u32 %v285, %v287
        %v292 = vshll.u32 %v289, 16
        %v293 = vshrl.u32 %v289, 16
        %v294 = vshll.u32 %v290, 16
        %v295 = vshrl.u32 %v290, 16
        %vm296 = vc.u32 %v288, %v292
        %v297 = vsel %vm296, 1, 0
        %v298 = vadd.s32 %v288, %v292
        %v299 = vadd.s32 %v291, %v297
        %vm300 = vc.u32 %v298, %v294
        %v301 = vsel %vm300, 1, 0
        %v302 = vadd.s32 %v298, %v294
        %v303 = vadd.s32 %v299, %v301
        %v304 = vadd.s32 %v303, %v293
        %v305 = vadd.s32 %v304, %v295
        %v306 = vand.u32 %v283, 65535
        %v307 = vshrl.u32 %v283, 16
        %v308 = vand.u32 %v278, 65535
        %v309 = vshrl.u32 %v278, 16
        %v310 = vmul.u32 %v306, %v308
        %v311 = vmul.u32 %v306, %v309
        %v312 = vmul.u32 %v307, %v308
        %v313 = vmul.u32 %v307, %v309
        %v314 = vshll.u32 %v311, 16
        %v315 = vshrl.u32 %v311, 16
        %v316 = vshll.u32 %v312, 16
        %v317 = vshrl.u32 %v312, 16
        %vm318 = vc.u32 %v310, %v314
        %v319 = vsel %vm318, 1, 0
        %v320 = vadd.s32 %v310, %v314
        %v321 = vadd.s32 %v313, %v319
        %vm322 = vc.u32 %v320, %v316
        %v323 = vsel %vm322, 1, 0
        %v324 = vadd.s32 %v320, %v316
        %v325 = vadd.s32 %v321, %v323
        %v326 = vadd.s32 %v325, %v315
        %v327 = vadd.s32 %v326, %v317
        %v328 = vmul.u32 %v283, %v274
        %v329 = vadd.s32 %v305, %v324
        %vm330 = vc.u32 %v305, %v324
        %v331 = vadd.s32 %v327, 1
        %v332 = vsel %vm330, %v331, %v327
        %v333 = vadd.s32 %v328, %v332
        %v334 = vadd.s32 %v333, 536870912
        %v335 = vshrl.u32 %v334, 30
        %v336 = vshll.u32 %v335, 30
        %v337 = vsub.s32 %v333, %v336
        %vm338 = vcmp.lt.s32.totalorder %v337, 0
        %v339 = vsub.s32 0, %v337
        %v340 = vsel %vm338, %v339, %v337
        %v341 = vclz %v340
        %v342 = vsub.s32 %v341, 2
        %vm343 = vcmp.gt.s32.totalorder 0, %v342
        %v344 = vsel %vm343, 0, %v342
        %v345 = vsub.s32 32, %v344
        %v346 = vshll.u32 %v337, %v344
        %v347 = vshrl.u32 %v329, %v345
        %v348 = vor.u32 %v346, %v347
        %v349 = vsub.s32 4294967266, %v344
        %v350 = vadd.s32 %v349, 127
        %v351 = vshll.u32 %v350, 23
        %v352 = vor.u32 4788187, %v351
        %v353 = vand.u32 2147483647, %v352
        %v355 = vcvt.s32.f32 %v348
        %v356 = vmul.f32 %v355, %v353
        %v357 = vxor.u32 %v356, 2147483648
        %v358 = vsel %vm237, %v357, %v356
        %v359 = vsub.s32 4, %v335
        %v360 = vsel %vm237, %v359, %v335
        %v361 = vsel %vm236, %v234, %v358
        %v362 = vsel %vm236, 0, %v360
        %v363 = vmul.f32 %v361, %v361
        %v364 = vmul.f32 %v363, -0.001358992
        %v365 = vadd.f32 %v364, 0.041655596
        %v366 = vmul.f32 %v363, %v365
        %v367 = vadd.f32 %v366, -0.4999988
        %v368 = vmul.f32 %v363, %v367
        %v369 = vadd.f32 1.0, %v368
        %v370 = vmul.f32 %v361, %v361
        %v371 = vmul.f32 %v370, -0.00019511016
        %v372 = vadd.f32 %v371, 0.008332121
        %v373 = vmul.f32 %v370, %v372
        %v374 = vadd.f32 %v373, -0.16666654
        %v375 = vmul.f32 %v370, %v374
        %v376 = vadd.f32 %v375, 1.0
        %v377 = vmul.f32 %v376, %v361
        %vm378 = vweird.f32 %v234
        %v379 = vadd.s32 %v362, 3
        %v380 = vand.u32 %v379, 3
        %vm381 = vcmp.lt.s32.totalorder %v380, 2
        %vm382 = vcmp.eq.s32.totalorder %v380, 0
        %v383 = vxor.u32 %v377, 2147483648
        %v384 = vsel %vm382, %v369, %v383
        %vm385 = vcmp.eq.s32.totalorder %v380, 2
        %v386 = vxor.u32 %v369, 2147483648
        %v387 = vsel %vm385, %v386, %v377
        %v388 = vsel %vm381, %v384, %v387
        %v389 = vsel %vm378, nan, %v388
        %v390 = vld [vmem:[%s190] sm:$0x3]
        %v391 = vadd.f32 %v390, %v389
        %392 = vst [vmem:[%s217] sm:$0x3] %v391
        %s393 = sand.u32 %s117, 1
        %s394 = scalar_lea.sflag [#allocation4], %s393
        %s395 = sand.u32 %s117, 1
        %s396 = smul.addr %s395, 2
        %s397 = scalar_lea.vmem [#allocation5], %s396
        // Predicated region
        $region37: #{tpu_custom_call.1} parent=31 // pred_check
          %p398 = pneg %p127
        $region38: #{tpu_custom_call.1} parent=31 // pred_check_branch
          %400 = sbr.rel (%p398) target = $region40
        $region39: #{tpu_custom_call.1} parent=31 // pred_region
          %402 = vsyncadd %s394, 0
          %s403 = sadd.s32 %s24, %s25
          %s404 = smul.addr %s403, 2
          %s405 = scalar_lea.hbm %s3, %s404
          %s407 = sshll.u32 %s397, 4
          %s408 = int_to_ptr.vmem [resolvable:$true] %s407
          %s409 = sshll.u32 %s405, 4
          %s410 = int_to_ptr.hbm [resolvable:$true] %s409
          %412 = dma.vmem_to_hbm [thread:$0]  %s408, 32, %s410, %s394
        $region40: #{tpu_custom_call.1} parent=31 // pred_fallthru
          _
      $region32: #{tpu_custom_call.1} parent=5 // pred_fallthru
        _
      %p413 = scmp.le.s32.totalorder 2, %s15
      // Predicated region
      $region41: #{tpu_custom_call.1} parent=5 // pred_check
        %p414 = pneg %p413
      $region42: #{tpu_custom_call.1} parent=5 // pred_check_branch
        %416 = sbr.rel (%p414) target = $region44
      $region43: #{tpu_custom_call.1} parent=5 // pred_region
        %s417 = ssub.s32 %s15, 2
        // Predicated region
        $region45: #{tpu_custom_call.1} parent=43 // pred_check
          %p418 = pneg %p133
        $region46: #{tpu_custom_call.1} parent=43 // pred_check_branch
          %420 = sbr.rel (%p418) target = $region48
        $region47: #{tpu_custom_call.1} parent=43 // pred_region
          %s421 = sand.u32 %s118, 1
          %s422 = scalar_lea.sflag [#allocation4], %s421
          %s423 = sand.u32 %s118, 1
          %s424 = smul.addr %s423, 2
          %s425 = scalar_lea.vmem [#allocation5], %s424
          %427 = dma.done %s422, 32
        $region48: #{tpu_custom_call.1} parent=43 // pred_fallthru
          _
      $region44: #{tpu_custom_call.1} parent=5 // pred_fallthru
        _
    $region6: #{tpu_custom_call.1} parent=1 // loop_footer
      %s19 = sadd.s32 1, %s15
    $region7: #{tpu_custom_call.1} parent=1 // loop_footer_branch
      %14 = sbr.rel target = $region3
    $region8: #{tpu_custom_call.1} parent=1 // loop_exit
      _
    %428 = vsyncpa [#allocation3], 1
    %s429 = scalar_lea.sflag [#allocation3], 1
    %430 = vsyncpa %s429, 1
    %431 = vsyncpa [#allocation4], 1
    %s432 = scalar_lea.sflag [#allocation4], 1
    %433 = vsyncpa %s432, 1

</llo_original>
